<compile_context>
chip_gen: v5e
topology: v5e:2x2
jax: 0.10.0
libtpu: 0.0.40
codegen_flags: <defaults>
</compile_context>

<pallas_src>
import functools

import jax
import jax.numpy as jnp
from jax.experimental import pallas as pl
from jax.experimental.pallas import tpu as pltpu


def _round_up(x, m):
    return (x + m - 1) // m * m


def _focal_loss_kernel(alpha_ref, logits_ref, labels_ref, loss_ref,
                       *, gamma, ignore_index):
    x = logits_ref[0].astype(jnp.float32)            # (C, TILE)
    labels = labels_ref[0]                           # (1, TILE) int32
    alpha = alpha_ref[...].astype(jnp.float32)       # (C, 1)

    ignore = labels == ignore_index                  # (1, TILE) bool

    # class-selection mask over the sublane (class) axis; no float one-hot is
    # materialized — masked sums select the true-class row directly.
    row = jax.lax.broadcasted_iota(jnp.int32, x.shape, 0)   # (C, TILE)
    sel = row == labels                                      # (C, TILE) bool

    # numerically stable log-softmax along classes (sublane reductions on XLU)
    m = jnp.max(x, axis=0, keepdims=True)                    # (1, TILE)
    shifted = x - m                                          # (C, TILE)
    denom = jnp.sum(jnp.exp(shifted), axis=0, keepdims=True)  # (1, TILE)
    log_denom = jnp.log(denom)

    x_true = jnp.sum(jnp.where(sel, shifted, 0.0), axis=0, keepdims=True)
    alpha_true = jnp.sum(jnp.where(sel, alpha, 0.0), axis=0, keepdims=True)

    log_p_true = x_true - log_denom                          # log pt
    p_true = jnp.exp(log_p_true)                             # pt
    one_minus = 1.0 - p_true

    # gamma is a static Python float: specialize at trace time to avoid the
    # log+exp pair that jnp.power lowers to on the single EUP slot.
    if gamma == 0.0:
        modular = jnp.ones_like(one_minus)
    elif gamma == 1.0:
        modular = one_minus
    elif gamma == 2.0:
        modular = one_minus * one_minus
    else:
        modular = jnp.power(one_minus, gamma)

    # F.cross_entropy(..., ignore_index, reduction='none') -> 0 at ignored px
    ce = jnp.where(ignore, 0.0, -log_p_true)
    loss_ref[0] = ce * modular * alpha_true


def focal_loss(y_pred, y_true, alpha, *, gamma=1.0, ignore_index=255,
               reduction=False, tile=None):
    """y_pred: (N, C, H, W) float logits, y_true: (N, H, W) int labels."""
    N, C, H, W = y_pred.shape
    HW = H * W

    # Pick the pixel tile: as large as a conservative VMEM budget allows
    # (keeps the double-buffered logits block small enough for v5e's 16 MiB
    # scoped default and v7x's 64 MiB physical VMEM), multiple of 128 lanes.
    if tile is None:
        itemsize = jnp.dtype(y_pred.dtype).itemsize
        budget = 6 * 1024 * 1024                       # double-buffered logits block
        cap = max(128, (budget // (2 * C * itemsize)) // 128 * 128)
        tile = min(8192, cap, _round_up(HW, 128))
    tile = max(128, (tile // 128) * 128)

    HW_pad = _round_up(HW, tile)

    # Free views: NCHW stays NCHW in HBM (no transpose pass).
    logits = y_pred.reshape(N, C, HW)
    labels = y_true.reshape(N, 1, HW).astype(jnp.int32)
    if HW_pad != HW:
        # tail padding: padded pixels carry ignore_index -> loss 0, sliced off
        logits = jnp.pad(logits, ((0, 0), (0, 0), (0, HW_pad - HW)))
        labels = jnp.pad(labels, ((0, 0), (0, 0), (0, HW_pad - HW)),
                         constant_values=ignore_index)

    alpha2 = jnp.asarray(alpha, jnp.float32).reshape(C, 1)

    kernel = functools.partial(_focal_loss_kernel, gamma=float(gamma),
                               ignore_index=int(ignore_index))

    losses = pl.pallas_call(
        kernel,
        out_shape=jax.ShapeDtypeStruct((N, 1, HW_pad), jnp.float32),
        grid_spec=pltpu.PrefetchScalarGridSpec(
            num_scalar_prefetch=0,
            grid=(N, HW_pad // tile),
            in_specs=[
                pl.BlockSpec((C, 1), lambda n, t: (0, 0)),          # alpha (broadcast)
                pl.BlockSpec((1, C, tile), lambda n, t: (n, 0, t)),  # logits
                pl.BlockSpec((1, 1, tile), lambda n, t: (n, 0, t)),  # labels
            ],
            out_specs=pl.BlockSpec((1, 1, tile), lambda n, t: (n, 0, t)),
        ),
        compiler_params=pltpu.CompilerParams(
            dimension_semantics=("parallel", "parallel"),
            vmem_limit_bytes=32 * 1024 * 1024),
    )(alpha2, logits, labels)

    losses = losses.reshape(N, HW_pad)[:, :HW].reshape(N, H, W)
    if reduction:
        # TODO(synk): could fuse the mean into the kernel via an SMEM accumulator;
        # kept as a tiny XLA epilogue for clarity.
        valid = (y_true != ignore_index).astype(jnp.float32)
        return losses.sum() / valid.sum()
    return losses


def _focal_loss_ref(y_pred, y_true, alpha, gamma=1.0, ignore_index=255):
    # pure-JAX reference mirroring the PyTorch forward (reduction=False)
    N, C, H, W = y_pred.shape
    alpha = jnp.asarray(alpha, jnp.float32).reshape(1, C, 1, 1)
    p = jax.nn.softmax(y_pred, axis=1)
    ignore = y_true == ignore_index
    y_idx = jnp.where(ignore, 0, y_true)
    one_hot = jax.nn.one_hot(y_idx, C, axis=1, dtype=jnp.float32)
    pt = jnp.sum(p * one_hot, axis=1)
    modular = jnp.power(1.0 - pt, gamma)
    cls_bal = jnp.sum(alpha * one_hot, axis=1)
    logp = jax.nn.log_softmax(y_pred, axis=1)
    ce = -jnp.sum(logp * one_hot, axis=1)
    ce = jnp.where(ignore, 0.0, ce)
    return ce * modular * cls_bal


if __name__ == "__main__":
    key = jax.random.PRNGKey(0)
    N, C, H, W = 2, 4, 16, 16
    gamma = 1.0
    ignore_index = 255

    k1, k2, k3 = jax.random.split(key, 3)
    y_pred = jax.random.normal(k1, (N, C, H, W), dtype=jnp.float32)
    y_true = jax.random.randint(k2, (N, H, W), 0, C).astype(jnp.int32)
    # mark some pixels as ignored to exercise the ignore_index path
    ignore_mask = jax.random.bernoulli(k3, 0.1, (N, H, W))
    y_true = jnp.where(ignore_mask, ignore_index, y_true)

    # deterministic per-class alpha weights (module takes them via __init__)
    alpha = jnp.linspace(0.5, 2.0, C, dtype=jnp.float32)

    losses = focal_loss(y_pred, y_true, alpha, gamma=gamma,
                        ignore_index=ignore_index, reduction=False)
    losses = jax.block_until_ready(losses)

    ref = _focal_loss_ref(y_pred, y_true, alpha, gamma=gamma,
                          ignore_index=ignore_index)
    assert losses.shape == (N, H, W)
    assert jnp.allclose(losses, ref, atol=1e-5, rtol=1e-5)

    # also exercise the reduction=True (mean) path
    mean_loss = focal_loss(y_pred, y_true, alpha, gamma=gamma,
                           ignore_index=ignore_index, reduction=True)
    mean_loss = jax.block_until_ready(mean_loss)
    valid = (y_true != ignore_index).astype(jnp.float32)
    assert jnp.allclose(mean_loss, ref.sum() / valid.sum(), atol=1e-5, rtol=1e-5)

    print("KERNEL_OK")
</pallas_src>

<mosaic_0001>
module attributes {stable_mosaic.version = 11 : i64} {
  func.func @_focal_loss_kernel(%arg0: i32, %arg1: i32, %arg2: memref<4x1xf32, #tpu.memory_space<vmem>>, %arg3: memref<1x4x256xf32, #tpu.memory_space<vmem>>, %arg4: memref<1x1x256xi32, #tpu.memory_space<vmem>>, %arg5: memref<1x1x256xf32, #tpu.memory_space<vmem>>) attributes {dimension_semantics = [#tpu.dimension_semantics<parallel>, #tpu.dimension_semantics<parallel>], iteration_bounds = array<i64: 2, 1>, scalar_prefetch = 0 : i64, scratch_operands = 0 : i64, tpu.core_type = #tpu.core_type<tc>, window_params = [{pipeline_mode = #tpu.pipeline_mode<synchronous>, transform_indices = @transform_0, window_bounds = array<i64: 4, 1>}, {transform_indices = @transform_1, window_bounds = array<i64: 1, 4, 256>}, {transform_indices = @transform_2, window_bounds = array<i64: 1, 1, 256>}, {transform_indices = @transform_3, window_bounds = array<i64: 1, 1, 256>}]} {
    %c0 = arith.constant 0 : index
    %c0_0 = arith.constant 0 : index
    %c0_1 = arith.constant 0 : index
    %0 = vector.load %arg3[%c0, %c0_0, %c0_1] : memref<1x4x256xf32, #tpu.memory_space<vmem>>, vector<1x4x256xf32>
    %1 = vector.shape_cast %0 : vector<1x4x256xf32> to vector<4x256xf32>
    %c0_2 = arith.constant 0 : index
    %c0_3 = arith.constant 0 : index
    %c0_4 = arith.constant 0 : index
    %2 = vector.load %arg4[%c0_2, %c0_3, %c0_4] : memref<1x1x256xi32, #tpu.memory_space<vmem>>, vector<1x1x256xi32>
    %3 = vector.shape_cast %2 : vector<1x1x256xi32> to vector<1x256xi32>
    %c0_5 = arith.constant 0 : index
    %c0_6 = arith.constant 0 : index
    %4 = vector.load %arg2[%c0_5, %c0_6] : memref<4x1xf32, #tpu.memory_space<vmem>>, vector<4x1xf32>
    %c255_i32 = arith.constant 255 : i32
    %5 = vector.broadcast %c255_i32 : i32 to vector<1x256xi32>
    %6 = arith.cmpi eq, %3, %5 : vector<1x256xi32>
    %7 = tpu.iota {dimensions = array<i32: 0>} : vector<4x256xi32>
    %8 = vector.broadcast %3 : vector<1x256xi32> to vector<4x256xi32>
    %9 = arith.cmpi eq, %7, %8 : vector<4x256xi32>
    %cst = arith.constant dense<0xFF800000> : vector<256xf32>
    %10 = vector.multi_reduction <maximumf>, %1, %cst [0] : vector<4x256xf32> to vector<256xf32>
    %11 = vector.shape_cast %10 : vector<256xf32> to vector<1x256xf32>
    %12 = vector.broadcast %11 : vector<1x256xf32> to vector<4x256xf32>
    %13 = arith.subf %1, %12 : vector<4x256xf32>
    %14 = math.exp %13 : vector<4x256xf32>
    %cst_7 = arith.constant dense<0.000000e+00> : vector<256xf32>
    %15 = vector.multi_reduction <add>, %14, %cst_7 [0] : vector<4x256xf32> to vector<256xf32>
    %16 = vector.shape_cast %15 : vector<256xf32> to vector<1x256xf32>
    %17 = math.log %16 : vector<1x256xf32>
    %cst_8 = arith.constant 0.000000e+00 : f32
    %18 = vector.broadcast %cst_8 : f32 to vector<4x256xf32>
    %19 = arith.select %9, %13, %18 : vector<4x256xi1>, vector<4x256xf32>
    %cst_9 = arith.constant dense<0.000000e+00> : vector<256xf32>
    %20 = vector.multi_reduction <add>, %19, %cst_9 [0] : vector<4x256xf32> to vector<256xf32>
    %21 = vector.shape_cast %20 : vector<256xf32> to vector<1x256xf32>
    %cst_10 = arith.constant 0.000000e+00 : f32
    %22 = vector.shape_cast %4 : vector<4x1xf32> to vector<4x1xf32>
    %23 = vector.broadcast %22 : vector<4x1xf32> to vector<4x256xf32>
    %24 = vector.broadcast %cst_10 : f32 to vector<4x256xf32>
    %25 = arith.select %9, %23, %24 : vector<4x256xi1>, vector<4x256xf32>
    %cst_11 = arith.constant dense<0.000000e+00> : vector<256xf32>
    %26 = vector.multi_reduction <add>, %25, %cst_11 [0] : vector<4x256xf32> to vector<256xf32>
    %27 = vector.shape_cast %26 : vector<256xf32> to vector<1x256xf32>
    %28 = arith.subf %21, %17 : vector<1x256xf32>
    %29 = math.exp %28 : vector<1x256xf32>
    %cst_12 = arith.constant 1.000000e+00 : f32
    %30 = vector.broadcast %cst_12 : f32 to vector<1x256xf32>
    %31 = arith.subf %30, %29 : vector<1x256xf32>
    %cst_13 = arith.constant 0.000000e+00 : f32
    %32 = vector.broadcast %cst_13 : f32 to vector<1x256xf32>
    %33 = arith.subf %32, %28 : vector<1x256xf32>
    %cst_14 = arith.constant 0.000000e+00 : f32
    %34 = vector.broadcast %cst_14 : f32 to vector<1x256xf32>
    %35 = arith.select %6, %34, %33 : vector<1x256xi1>, vector<1x256xf32>
    %36 = arith.mulf %35, %31 : vector<1x256xf32>
    %37 = arith.mulf %36, %27 : vector<1x256xf32>
    %c0_15 = arith.constant 0 : index
    %c0_16 = arith.constant 0 : index
    %c0_17 = arith.constant 0 : index
    %38 = vector.load %arg5[%c0_15, %c0_16, %c0_17] : memref<1x1x256xf32, #tpu.memory_space<vmem>>, vector<1x1x256xf32>
    %39 = vector.shape_cast %38 : vector<1x1x256xf32> to vector<1x256xf32>
    %40 = vector.shape_cast %37 : vector<1x256xf32> to vector<1x1x256xf32>
    tpu.vector_store %arg5[%c0_15, %c0_16, %c0_17], %40 {strides = array<i32>} : memref<1x1x256xf32, #tpu.memory_space<vmem>>, vector<1x1x256xf32>,
    return
  }
  func.func @transform_0(%arg0: i32, %arg1: i32) -> (i32, i32) {
    %c0_i32 = arith.constant 0 : i32
    %c0_i32_0 = arith.constant 0 : i32
    %c0_i32_1 = arith.constant 0 : i32
    return %c0_i32, %c0_i32_0 : i32, i32
  }
  func.func @transform_1(%arg0: i32, %arg1: i32) -> (i32, i32, i32) {
    %c0_i32 = arith.constant 0 : i32
    %c0_i32_0 = arith.constant 0 : i32
    return %arg0, %c0_i32, %arg1 : i32, i32, i32
  }
  func.func @transform_2(%arg0: i32, %arg1: i32) -> (i32, i32, i32) {
    %c0_i32 = arith.constant 0 : i32
    %c0_i32_0 = arith.constant 0 : i32
    return %arg0, %c0_i32, %arg1 : i32, i32, i32
  }
  func.func @transform_3(%arg0: i32, %arg1: i32) -> (i32, i32, i32) {
    %c0_i32 = arith.constant 0 : i32
    %c0_i32_0 = arith.constant 0 : i32
    return %arg0, %c0_i32, %arg1 : i32, i32, i32
  }
}

</mosaic_0001>

<llo_original>
// kernel: tpu_custom_call.1
$region0: #{tpu_custom_call.1}
  #allocation0 [shape = 'u32[]', space=smem, size = 0x4, offset = 0x4, fixed_abs, tag = 'smem constant byte address 0x4 - core index']
  #allocation1 [shape = 'u32[72,128]{1,0:T(1,128)}', space=vmem, size = 0x9000, scoped, tag = 'internal scratch']
  %s0 = inlined_call_operand.vmem [shape: f32[4,1], index: 0, kind: input, shape index: {}]
  %s1 = inlined_call_operand.hbm [shape: f32[2,4,256], index: 1, kind: input, shape index: {}]
  %s2 = inlined_call_operand.vmem [shape: s32[2,1,256], index: 2, kind: input, shape index: {}]
  %s3 = inlined_call_operand.hbm [shape: f32[2,1,256], index: 3, kind: output, shape index: {}]
  %s4 = sld [smem:[#allocation0]]
  $region49: #{tpu_custom_call.1} parent=0
    _
  %s6 = ssub.s32 1, %s4
  %s7 = scalar_select 0, %s6, %s4
  $region1: #{tpu_custom_call.1} parent=0
    #allocation2 [shape = 'u8[8192]{0}', space=vmem, size = 0x2000, scoped, tag = 'input window, operand 1']
    #allocation3 [shape = 's32[2]{0}', space=sflag, size = 0x8, scoped, tag = 'scoped memory for tpu_custom_call.1']
    #allocation4 [shape = 's32[2]{0}', space=sflag, size = 0x8, scoped, tag = 'scoped memory for tpu_custom_call.1']
    #allocation5 [shape = 'u8[2048]{0}', space=vmem, size = 0x800, scoped, tag = 'output window, operand 0']
    %8 = vsyncpa [#allocation3], 0
    %s9 = scalar_lea.sflag [#allocation3], 1
    %10 = vsyncpa %s9, 0
    %11 = vsyncpa [#allocation4], 0
    %s12 = scalar_lea.sflag [#allocation4], 1
    %13 = vsyncpa %s12, 0
    loop: start=0, step=1, limit=4
    $region2: #{tpu_custom_call.1} parent=1 // loop_pre_header
      _
    $region3: #{tpu_custom_call.1} parent=1 // loop_header
      %s15 = sphi 0, %s19
      %p16 = scmp.ge.s32.totalorder %s15, 4
      %s22 = sphi 0, %s34
      %s23 = sphi 0, %s30
      %s24 = sphi 0, %s22
      %s25 = sphi 0, %s23
      %s26 = sphi 0, %s24
      %s27 = sphi 0, %s25
      %s35 = sphi 0, %s35
      %s37 = sphi 0, %s35
      %s38 = sphi 0, %s37
      %s52 = sphi 0, %s38
      %s60 = sphi 0, %s62
      %s63 = sphi 0, %s60
      %s64 = sphi 0, %s63
      %s80 = sphi 0, %s64
      %s88 = sphi 0, %s90
      %s91 = sphi 0, %s88
      %s92 = sphi 0, %s91
      %s108 = sphi 0, %s92
      %s116 = sphi 0, %s118
      %s119 = sphi 0, %s116
      %s120 = sphi 0, %s119
      %s136 = sphi 0, %s120
    $region4: #{tpu_custom_call.1} parent=1 // loop_header_branch
      %18 = sbr.rel (%p16) target = $region8
    $region5: #{tpu_custom_call.1} parent=1 // loop_body
      %s20 = ssub.s32 %s15, 1
      %s21 = ssub.s32 %s15, 2
      %s28 = sadd.s32 1, %s23
      %p29 = scmp.ge.s32.totalorder %s28, 1
      %s30 = scalar_select %p29, 0, %s28
      %s31 = sadd.s32 1, %s22
      %s32 = scalar_select %p29, %s31, %s22
      %p33 = scmp.ge.s32.totalorder %s32, 2
      %s34 = scalar_select %p33, 0, %s32
      %s36 = sadd.s32 %s35, 1
      %p39 = scmp.eq.s32.totalorder %s15, 1
      %p40 = scmp.ne.s32.totalorder %s35, %s37
      %p41 = scmp.eq.s32.totalorder %s15, 0
      %p42 = por %p40, %p41
      %p43 = scmp.ne.s32.totalorder %s35, %s37
      %p44 = scmp.eq.s32.totalorder %s20, 1
      %p45 = por %p43, %p44
      %p46 = scmp.ne.s32.totalorder %s37, %s38
      %p47 = scmp.eq.s32.totalorder %s20, 0
      %p48 = por %p46, %p47
      %p49 = scmp.ne.s32.totalorder %s37, %s38
      %p50 = scmp.eq.s32.totalorder %s21, 1
      %p51 = por %p49, %p50
      %p53 = scmp.ne.s32.totalorder %s38, %s52
      %p54 = scmp.eq.s32.totalorder %s21, 0
      %p55 = por %p53, %p54
      %s56 = ssub.s32 %s22, %s34
      %s57 = ssub.s32 %s23, %s30
      %s58 = sor.u32 %s56, %s57
      %p59 = scmp.eq.s32.totalorder %s58, 0
      %s61 = sadd.s32 %s60, 1
      %s62 = scalar_select %p59, %s60, %s61
      %p65 = pneg %p59
      %p66 = scmp.eq.s32.totalorder %s15, 1
      %p67 = por %p65, %p66
      %p68 = scmp.ne.s32.totalorder %s60, %s63
      %p69 = scmp.eq.s32.totalorder %s15, 0
      %p70 = por %p68, %p69
      %p71 = scmp.ne.s32.totalorder %s60, %s63
      %p72 = scmp.eq.s32.totalorder %s20, 1
      %p73 = por %p71, %p72
      %p74 = scmp.ne.s32.totalorder %s63, %s64
      %p75 = scmp.eq.s32.totalorder %s20, 0
      %p76 = por %p74, %p75
      %p77 = scmp.ne.s32.totalorder %s63, %s64
      %p78 = scmp.eq.s32.totalorder %s21, 1
      %p79 = por %p77, %p78
      %p81 = scmp.ne.s32.totalorder %s64, %s80
      %p82 = scmp.eq.s32.totalorder %s21, 0
      %p83 = por %p81, %p82
      %s84 = ssub.s32 %s22, %s34
      %s85 = ssub.s32 %s23, %s30
      %s86 = sor.u32 %s84, %s85
      %p87 = scmp.eq.s32.totalorder %s86, 0
      %s89 = sadd.s32 %s88, 1
      %s90 = scalar_select %p87, %s88, %s89
      %p93 = pneg %p87
      %p94 = scmp.eq.s32.totalorder %s15, 1
      %p95 = por %p93, %p94
      %p96 = scmp.ne.s32.totalorder %s88, %s91
      %p97 = scmp.eq.s32.totalorder %s15, 0
      %p98 = por %p96, %p97
      %p99 = scmp.ne.s32.totalorder %s88, %s91
      %p100 = scmp.eq.s32.totalorder %s20, 1
      %p101 = por %p99, %p100
      %p102 = scmp.ne.s32.totalorder %s91, %s92
      %p103 = scmp.eq.s32.totalorder %s20, 0
      %p104 = por %p102, %p103
      %p105 = scmp.ne.s32.totalorder %s91, %s92
      %p106 = scmp.eq.s32.totalorder %s21, 1
      %p107 = por %p105, %p106
      %p109 = scmp.ne.s32.totalorder %s92, %s108
      %p110 = scmp.eq.s32.totalorder %s21, 0
      %p111 = por %p109, %p110
      %s112 = ssub.s32 %s22, %s34
      %s113 = ssub.s32 %s23, %s30
      %s114 = sor.u32 %s112, %s113
      %p115 = scmp.eq.s32.totalorder %s114, 0
      %s117 = sadd.s32 %s116, 1
      %s118 = scalar_select %p115, %s116, %s117
      %p121 = pneg %p115
      %p122 = scmp.eq.s32.totalorder %s15, 1
      %p123 = por %p121, %p122
      %p124 = scmp.ne.s32.totalorder %s116, %s119
      %p125 = scmp.eq.s32.totalorder %s15, 0
      %p126 = por %p124, %p125
      %p127 = scmp.ne.s32.totalorder %s116, %s119
      %p128 = scmp.eq.s32.totalorder %s20, 1
      %p129 = por %p127, %p128
      %p130 = scmp.ne.s32.totalorder %s119, %s120
      %p131 = scmp.eq.s32.totalorder %s20, 0
      %p132 = por %p130, %p131
      %p133 = scmp.ne.s32.totalorder %s119, %s120
      %p134 = scmp.eq.s32.totalorder %s21, 1
      %p135 = por %p133, %p134
      %p137 = scmp.ne.s32.totalorder %s120, %s136
      %p138 = scmp.eq.s32.totalorder %s21, 0
      %p139 = por %p137, %p138
      %p140 = scmp.le.s32.totalorder 1, %s15
      %p141 = scmp.lt.s32.totalorder %s15, 3
      %p142 = pnand %p140, %p141
      %p143 = pneg %p142
      // Predicated region
      $region9: #{tpu_custom_call.1} parent=5 // pred_check
        _
      $region10: #{tpu_custom_call.1} parent=5 // pred_check_branch
        %145 = sbr.rel (%p142) target = $region12
      $region11: #{tpu_custom_call.1} parent=5 // pred_region
        %s146 = ssub.s32 %s15, 1
        // Predicated region
        $region13: #{tpu_custom_call.1} parent=11 // pred_check
          %p147 = pneg %p48
        $region14: #{tpu_custom_call.1} parent=11 // pred_check_branch
          %149 = sbr.rel (%p147) target = $region16
        $region15: #{tpu_custom_call.1} parent=11 // pred_region
          _
        $region16: #{tpu_custom_call.1} parent=11 // pred_fallthru
          _
      $region12: #{tpu_custom_call.1} parent=5 // pred_fallthru
        _
      %p150 = scmp.lt.s32.totalorder %s15, 2
      // Predicated region
      $region17: #{tpu_custom_call.1} parent=5 // pred_check
        %p151 = pneg %p150
      $region18: #{tpu_custom_call.1} parent=5 // pred_check_branch
        %153 = sbr.rel (%p151) target = $region20
      $region19: #{tpu_custom_call.1} parent=5 // pred_region
        // Predicated region
        $region21: #{tpu_custom_call.1} parent=19 // pred_check
          %p154 = pneg %p70
        $region22: #{tpu_custom_call.1} parent=19 // pred_check_branch
          %156 = sbr.rel (%p154) target = $region24
        $region23: #{tpu_custom_call.1} parent=19 // pred_region
          %s157 = sand.u32 %s60, 1
          %s158 = scalar_lea.sflag [#allocation3], %s157
          %s159 = sand.u32 %s60, 1
          %s160 = smul.addr %s159, 8
          %s161 = scalar_lea.vmem [#allocation2], %s160
          %s162 = smul.u32 2, %s23
          %164 = vsyncadd %s158, 0
          %s165 = smul.addr %s22, 2
          %s166 = sadd.s32 %s162, %s165
          %s167 = smul.addr %s166, 4
          %s168 = scalar_lea.hbm %s1, %s167
          %s170 = sshll.u32 %s168, 4
          %s171 = int_to_ptr.hbm [resolvable:$true] %s170
          %s172 = sshll.u32 %s161, 4
          %s173 = int_to_ptr.vmem [resolvable:$true] %s172
          %175 = dma.hbm_to_vmem [thread:$0]  %s171, 128, %s173, %s158
        $region24: #{tpu_custom_call.1} parent=19 // pred_fallthru
          _
        // Predicated region
        $region25: #{tpu_custom_call.1} parent=19 // pred_check
          %p176 = pneg %p98
        $region26: #{tpu_custom_call.1} parent=19 // pred_check_branch
          %178 = sbr.rel (%p176) target = $region28
        $region27: #{tpu_custom_call.1} parent=19 // pred_region
          %s179 = smul.u32 2, %s23
          %p180 = scmp.lt.s32.totalorder %s22, 1
          %s181 = scalar_select %p180, %s22, 1
          %p182 = scmp.lt.s32.totalorder %s179, 1
          %s183 = scalar_select %p182, %s179, 1
          %s184 = smul.addr %s181, 2
          %s185 = sadd.s32 %s183, %s184
          %s186 = scalar_lea.vmem %s2, %s185
          %s187 = smul.u32 2, %s23
        $region28: #{tpu_custom_call.1} parent=19 // pred_fallthru
          _
      $region20: #{tpu_custom_call.1} parent=5 // pred_fallthru
        _
      %p188 = scmp.le.s32.totalorder 1, %s15
      %p189 = scmp.lt.s32.totalorder %s15, 3
      %p190 = pnand %p188, %p189
      %p191 = pneg %p190
      // Predicated region
      $region29: #{tpu_custom_call.1} parent=5 // pred_check
        _
      $region30: #{tpu_custom_call.1} parent=5 // pred_check_branch
        %193 = sbr.rel (%p190) target = $region32
      $region31: #{tpu_custom_call.1} parent=5 // pred_region
        %s194 = ssub.s32 %s15, 1
        %s195 = sand.u32 %s63, 1
        %s196 = scalar_lea.sflag [#allocation3], %s195
        %s197 = sand.u32 %s63, 1
        %s198 = smul.addr %s197, 8
        %s199 = scalar_lea.vmem [#allocation2], %s198
        // Predicated region
        $region33: #{tpu_custom_call.1} parent=31 // pred_check
          %p200 = pneg %p76
        $region34: #{tpu_custom_call.1} parent=31 // pred_check_branch
          %202 = sbr.rel (%p200) target = $region36
        $region35: #{tpu_custom_call.1} parent=31 // pred_region
          %204 = dma.done %s196, 128
        $region36: #{tpu_custom_call.1} parent=31 // pred_fallthru
          _
        %p205 = pneg %p48
        %p206 = pneg %p45
        %s207 = sand.u32 %s63, 1
        %s208 = scalar_lea.sflag [#allocation3], %s207
        %s209 = sand.u32 %s63, 1
        %s210 = smul.addr %s209, 8
        %s211 = scalar_lea.vmem [#allocation2], %s210
        %p212 = pneg %p76
        %p213 = pneg %p73
        %s214 = smul.u32 2, %s25
        %p215 = scmp.lt.s32.totalorder %s24, 1
        %s216 = scalar_select %p215, %s24, 1
        %p217 = scmp.lt.s32.totalorder %s214, 1
        %s218 = scalar_select %p217, %s214, 1
        %s219 = smul.addr %s216, 2
        %s220 = sadd.s32 %s218, %s219
        %s221 = scalar_lea.vmem %s2, %s220
        %p222 = pneg %p104
        %p223 = pneg %p101
        %p224 = pneg %p132
        %p225 = pneg %p129
        %s226 = sand.u32 %s119, 1
        %s227 = scalar_lea.sflag [#allocation4], %s226
        %s228 = sand.u32 %s119, 1
        %s229 = smul.addr %s228, 2
        %s230 = scalar_lea.vmem [#allocation5], %s229
        %s231 = smul.u32 2, %s25
        %s232 = smul.u32 2, %s25
        %p233 = scmp.lt.s32.totalorder %s24, 1
        %s234 = scalar_select %p233, %s24, 1
        %p235 = scmp.lt.s32.totalorder %s232, 1
        %s236 = scalar_select %p235, %s232, 1
        %s237 = smul.addr %s234, 2
        %s238 = sadd.s32 %s236, %s237
        %s239 = scalar_lea.vmem %s2, %s238
        %s240 = smul.u32 2, %s25
        %s241 = smul.u32 2, %s25
        %v242 = vld [vmem:[%s199] sm:$0xff]
        %v243 = vld [vmem:[%s239] sm:$0x3]
        %v244 = vld [vmem:[%s0] sm:$0xf]
        %vm245 = vcmp.eq.s32.totalorder %v243, 255
        %v246 = vlaneseq
        %v247 = vshrl.u32 %v246, 7
        %v248 = vperm.slane %v243, 0
        %v249 = vperm.slane %v243, 1
        %vm250 = vcmp.eq.s32.totalorder %v247, %v248
        %vm251 = vcmp.eq.s32.totalorder %v247, %v249
        %253 = vst [vmem:[#allocation1] ss:$2 sm:$0xff] %v242
        %v254 = vld.sshfl [vmem:[#allocation1] sm:$0xff pattern:$0x75316420]
        %v255 = vld.sshfl [vmem:[#allocation1 + $0x8] sm:$0xff pattern:$0x75316420]
        %vm258 = vcmask 1043456
        %v259 = vsel %vm258, %v254, -inf
        %v260 = vrot.slane %v259, 4
        %v261 = vmax.f32 %v259, %v260
        %v262 = vrot.slane %v261, 2
        %v263 = vmax.f32 %v261, %v262
        %v264 = vrot.slane %v263, 1
        %v265 = vmax.f32 %v263, %v264
        %v266 = vsel %vm258, %v255, -inf
        %v267 = vrot.slane %v266, 4
        %v268 = vmax.f32 %v266, %v267
        %v269 = vrot.slane %v268, 2
        %v270 = vmax.f32 %v268, %v269
        %v271 = vrot.slane %v270, 1
        %v272 = vmax.f32 %v270, %v271
        %v275 = vrot.slane %v272, 4
        %v276 = vsel %vm258, %v265, %v275
        %v278 = vsub.f32 %v242, %v276
        %v279 = vmul.f32 %v278, 1.442695
        %v280 = vpow.pop %v279
        %282 = vst [vmem:[#allocation1] ss:$2 sm:$0xff] %v280
        %v283 = vld.sshfl [vmem:[#allocation1] sm:$0xff pattern:$0x75316420]
        %v284 = vld.sshfl [vmem:[#allocation1 + $0x8] sm:$0xff pattern:$0x75316420]
        %v287 = vsel %vm258, %v283, 0.0
        %v288 = vrot.slane %v287, 4
        %v289 = vadd.f32 %v287, %v288
        %v290 = vrot.slane %v289, 2
        %v291 = vadd.f32 %v289, %v290
        %v292 = vrot.slane %v291, 1
        %v293 = vadd.f32 %v291, %v292
        %v294 = vsel %vm258, %v284, 0.0
        %v295 = vrot.slane %v294, 4
        %v296 = vadd.f32 %v294, %v295
        %v297 = vrot.slane %v296, 2
        %v298 = vadd.f32 %v296, %v297
        %v299 = vrot.slane %v298, 1
        %v300 = vadd.f32 %v298, %v299
        %v301 = vlog2.pop %v293
        %v302 = vmul.f32 %v301, 0.6931472
        %v303 = vlog2.pop %v300
        %v304 = vmul.f32 %v303, 0.6931472
        %306 = vst [vmem:[#allocation1] ss:$2 sm:$0xff] %v278
        %v307 = vld.sshfl [vmem:[#allocation1] sm:$0xff pattern:$0x75316420]
        %v308 = vld.sshfl [vmem:[#allocation1 + $0x8] sm:$0xff pattern:$0x75316420]
        %v311 = vsel %vm250, %v307, 0.0
        %v312 = vsel %vm251, %v308, 0.0
        %v313 = vsel %vm258, %v311, 0.0
        %v314 = vrot.slane %v313, 4
        %v315 = vadd.f32 %v313, %v314
        %v316 = vrot.slane %v315, 2
        %v317 = vadd.f32 %v315, %v316
        %v318 = vrot.slane %v317, 1
        %v319 = vadd.f32 %v317, %v318
        %v320 = vsel %vm258, %v312, 0.0
        %v321 = vrot.slane %v320, 4
        %v322 = vadd.f32 %v320, %v321
        %v323 = vrot.slane %v322, 2
        %v324 = vadd.f32 %v322, %v323
        %v325 = vrot.slane %v324, 1
        %v326 = vadd.f32 %v324, %v325
        %328 = vset.pattern.permute.xlu0 0
        %329 = vperm.xlu0 %328, %v244
        %v330 = vpop.permute.xlu0 %329
        %v332 = vsel %vm250, %v330, 0.0
        %v333 = vsel %vm251, %v330, 0.0
        %v334 = vsel %vm258, %v332, 0.0
        %v335 = vrot.slane %v334, 4
        %v336 = vadd.f32 %v334, %v335
        %v337 = vrot.slane %v336, 2
        %v338 = vadd.f32 %v336, %v337
        %v339 = vrot.slane %v338, 1
        %v340 = vadd.f32 %v338, %v339
        %v341 = vsel %vm258, %v333, 0.0
        %v342 = vrot.slane %v341, 4
        %v343 = vadd.f32 %v341, %v342
        %v344 = vrot.slane %v343, 2
        %v345 = vadd.f32 %v343, %v344
        %v346 = vrot.slane %v345, 1
        %v347 = vadd.f32 %v345, %v346
        %v348 = vsub.f32 %v319, %v302
        %v349 = vsub.f32 %v326, %v304
        %v350 = vmul.f32 %v348, 1.442695
        %v351 = vpow.pop %v350
        %v352 = vmul.f32 %v349, 1.442695
        %v353 = vpow.pop %v352
        %v354 = vsub.f32 1.0, %v351
        %v355 = vsub.f32 1.0, %v353
        %v356 = vsub.f32 0.0, %v348
        %v357 = vsub.f32 0.0, %v349
        %v360 = vrot.slane %v357, 7
        %vm361 = vcmask 1040384
        %v362 = vsel %vm361, %v356, %v360
        %v364 = vsel %vm245, 0.0, %v362
        %v367 = vrot.slane %v355, 7
        %v368 = vsel %vm361, %v354, %v367
        %v370 = vmul.f32 %v364, %v368
        %v373 = vrot.slane %v347, 7
        %v374 = vsel %vm361, %v340, %v373
        %v376 = vmul.f32 %v370, %v374
        %v377 = vlaneseq
        %vm378 = vcmp.ge.s32.totalorder %v377, 0
        %vm379 = vcmp.lt.s32.totalorder %v377, 256
        %vm380 = vmand %vm378, %vm379
        %381 = vst.msk [vmem:[%s230] sm:$0x3] %vm380, %v376
        %s382 = sand.u32 %s119, 1
        %s383 = scalar_lea.sflag [#allocation4], %s382
        %s384 = sand.u32 %s119, 1
        %s385 = smul.addr %s384, 2
        %s386 = scalar_lea.vmem [#allocation5], %s385
        // Predicated region
        $region37: #{tpu_custom_call.1} parent=31 // pred_check
          %p387 = pneg %p129
        $region38: #{tpu_custom_call.1} parent=31 // pred_check_branch
          %389 = sbr.rel (%p387) target = $region40
        $region39: #{tpu_custom_call.1} parent=31 // pred_region
          %s390 = smul.u32 2, %s25
          %392 = vsyncadd %s383, 0
          %s393 = smul.addr %s24, 2
          %s394 = sadd.s32 %s390, %s393
          %s395 = scalar_lea.hbm %s3, %s394
          %s397 = sshll.u32 %s386, 4
          %s398 = int_to_ptr.vmem [resolvable:$true] %s397
          %s399 = sshll.u32 %s395, 4
          %s400 = int_to_ptr.hbm [resolvable:$true] %s399
          %402 = dma.vmem_to_hbm [thread:$0]  %s398, 32, %s400, %s383
        $region40: #{tpu_custom_call.1} parent=31 // pred_fallthru
          _
      $region32: #{tpu_custom_call.1} parent=5 // pred_fallthru
        _
      %p403 = scmp.le.s32.totalorder 2, %s15
      // Predicated region
      $region41: #{tpu_custom_call.1} parent=5 // pred_check
        %p404 = pneg %p403
      $region42: #{tpu_custom_call.1} parent=5 // pred_check_branch
        %406 = sbr.rel (%p404) target = $region44
      $region43: #{tpu_custom_call.1} parent=5 // pred_region
        %s407 = ssub.s32 %s15, 2
        // Predicated region
        $region45: #{tpu_custom_call.1} parent=43 // pred_check
          %p408 = pneg %p135
        $region46: #{tpu_custom_call.1} parent=43 // pred_check_branch
          %410 = sbr.rel (%p408) target = $region48
        $region47: #{tpu_custom_call.1} parent=43 // pred_region
          %s411 = sand.u32 %s120, 1
          %s412 = scalar_lea.sflag [#allocation4], %s411
          %s413 = sand.u32 %s120, 1
          %s414 = smul.addr %s413, 2
          %s415 = scalar_lea.vmem [#allocation5], %s414
          %417 = dma.done %s412, 32
        $region48: #{tpu_custom_call.1} parent=43 // pred_fallthru
          _
      $region44: #{tpu_custom_call.1} parent=5 // pred_fallthru
        _
    $region6: #{tpu_custom_call.1} parent=1 // loop_footer
      %s19 = sadd.s32 1, %s15
    $region7: #{tpu_custom_call.1} parent=1 // loop_footer_branch
      %14 = sbr.rel target = $region3
    $region8: #{tpu_custom_call.1} parent=1 // loop_exit
      _
    %418 = vsyncpa [#allocation3], 1
    %s419 = scalar_lea.sflag [#allocation3], 1
    %420 = vsyncpa %s419, 1
    %421 = vsyncpa [#allocation4], 1
    %s422 = scalar_lea.sflag [#allocation4], 1
    %423 = vsyncpa %s422, 1

</llo_original>
